<compile_context>
chip_gen: v7x
topology: tpu7x:2x2x1
jax: 0.10.0
libtpu: 0.0.40
codegen_flags: <defaults>
</compile_context>

<pallas_src>
import jax
import jax.numpy as jnp
import numpy as np
from jax.experimental import pallas as pl
from jax.experimental.pallas import tpu as pltpu

BN_EPS = 1e-5

ROW_SLAB_SUBLANES = 8
ROW_SLAB_LANES = 128


def _round_up(x, m):
    return (x + m - 1) // m * m


# ----------------------------------------------------------------------------
# Kernel
# ----------------------------------------------------------------------------
def make_critic_kernel(input_dim, hidden_in, action_dim, hidden_out, out_dim,
                       w1_r0, w2h_r0, w2a_r0, w3_r0):
    """Builds the kernel with all slab offsets / feature widths as static ints."""

    def kernel(xa_ref, rows_ref, w_ref, out_ref):
        # --- unpack the three slabs (static slices) ---
        xa = xa_ref[0]                                   # (B, input_dim+action_dim)
        x = xa[:, :input_dim]                            # (B, input_dim)
        a = xa[:, input_dim:input_dim + action_dim]      # (B, action_dim)

        rows = rows_ref[0]                               # (8, 128)
        w = w_ref[0]                                     # (W_ROWS, W_LANES)

        b1      = rows[0:1, :hidden_in]
        gamma_h = rows[1:2, :hidden_in]
        beta_h  = rows[2:3, :hidden_in]
        gamma_a = rows[3:4, :action_dim]
        beta_a  = rows[4:5, :action_dim]
        b2      = rows[5:6, :hidden_out]
        b3      = rows[6:7, :out_dim]

        w1  = w[w1_r0:w1_r0 + input_dim,  :hidden_in]
        w2h = w[w2h_r0:w2h_r0 + hidden_in, :hidden_out]
        w2a = w[w2a_r0:w2a_r0 + action_dim, :hidden_out]
        w3  = w[w3_r0:w3_r0 + hidden_out, :out_dim]

        # --- fc1 + relu ---
        h1 = jnp.maximum(
            jnp.dot(x, w1, preferred_element_type=jnp.float32) + b1, 0.0)

        # --- BatchNorm1d (training mode: batch mean, biased batch variance),
        #     evaluated per feature-half, folded to one scale/shift.      ---
        def bn_scale_shift(v, gamma, beta):
            mean = jnp.mean(v, axis=0, keepdims=True)
            var = jnp.maximum(
                jnp.mean(v * v, axis=0, keepdims=True) - mean * mean, 0.0)
            scale = gamma * jax.lax.rsqrt(var + BN_EPS)
            shift = beta - mean * scale
            return v * scale + shift

        xn_h = bn_scale_shift(h1, gamma_h, beta_h)   # (B, hidden_in)
        xn_a = bn_scale_shift(a, gamma_a, beta_a)    # (B, action_dim)

        # --- fc2 (split accumulation over the two BN halves) + relu ---
        h2 = jnp.maximum(
            jnp.dot(xn_h, w2h, preferred_element_type=jnp.float32)
            + jnp.dot(xn_a, w2a, preferred_element_type=jnp.float32)
            + b2, 0.0)

        # --- fc3 ---
        out_ref[0] = jnp.dot(h2, w3, preferred_element_type=jnp.float32) + b3

    return kernel


# ----------------------------------------------------------------------------
# One-time parameter packing (hoisted out of the per-step path)
# ----------------------------------------------------------------------------
def pack_params(params, input_dim, hidden_in, action_dim, hidden_out, out_dim):
    """Packs all parameters of ONE network into two f32 slabs.

    rows slab : (8, 128)   -- b1 / gamma_h / beta_h / gamma_a / beta_a / b2 / b3
    weight slab: (W_ROWS, W_LANES) -- w1, w2_h, w2_a, w3 stacked along sublanes,
                 each block aligned to a multiple-of-8 sublane offset.
    """
    gamma = params["gamma"].reshape(-1)
    beta = params["beta"].reshape(-1)

    rows = jnp.zeros((ROW_SLAB_SUBLANES, ROW_SLAB_LANES), jnp.float32)
    rows = rows.at[0, :hidden_in].set(params["b1"].reshape(-1))
    rows = rows.at[1, :hidden_in].set(gamma[:hidden_in])
    rows = rows.at[2, :hidden_in].set(beta[:hidden_in])
    rows = rows.at[3, :action_dim].set(gamma[hidden_in:])
    rows = rows.at[4, :action_dim].set(beta[hidden_in:])
    rows = rows.at[5, :hidden_out].set(params["b2"].reshape(-1))
    rows = rows.at[6, :out_dim].set(params["b3"].reshape(-1))

    w1_r0 = 0
    w2h_r0 = _round_up(w1_r0 + input_dim, 8)
    w2a_r0 = _round_up(w2h_r0 + hidden_in, 8)
    w3_r0 = _round_up(w2a_r0 + action_dim, 8)
    total_rows = _round_up(w3_r0 + hidden_out, 8)
    lane_w = max(hidden_in, hidden_out, out_dim)

    wslab = jnp.zeros((total_rows, lane_w), jnp.float32)
    wslab = wslab.at[w1_r0:w1_r0 + input_dim, :hidden_in].set(params["w1"])
    wslab = wslab.at[w2h_r0:w2h_r0 + hidden_in, :hidden_out].set(
        params["w2"][:hidden_in, :])
    wslab = wslab.at[w2a_r0:w2a_r0 + action_dim, :hidden_out].set(
        params["w2"][hidden_in:, :])
    wslab = wslab.at[w3_r0:w3_r0 + hidden_out, :out_dim].set(params["w3"])

    offsets = dict(w1_r0=w1_r0, w2h_r0=w2h_r0, w2a_r0=w2a_r0, w3_r0=w3_r0)
    return rows, wslab, offsets


# ----------------------------------------------------------------------------
# Forward wrapper: ONE pallas_call for N independent networks (grid axis)
# ----------------------------------------------------------------------------
def critic_forward(xa, rows, wslab, *, input_dim, hidden_in, action_dim,
                   hidden_out, out_dim, offsets):
    """xa: (N, B, input_dim+action_dim); rows: (N, 8, 128); wslab: (N, W_ROWS, W_LANES).

    Each grid point evaluates one full network over its full batch, so BN batch
    statistics are exact per network. dimension_semantics=("parallel",) lets
    Mosaic shard the N networks across TensorCores (v7x: 2 TCs/chip).
    """
    N, B, F = xa.shape
    _, w_rows, w_lanes = wslab.shape

    kernel = make_critic_kernel(
        input_dim, hidden_in, action_dim, hidden_out, out_dim,
        offsets["w1_r0"], offsets["w2h_r0"], offsets["w2a_r0"], offsets["w3_r0"])

    return pl.pallas_call(
        kernel,
        out_shape=jax.ShapeDtypeStruct((N, B, out_dim), jnp.float32),
        grid=(N,),
        in_specs=[
            pl.BlockSpec((1, B, F), lambda n: (n, 0, 0)),
            pl.BlockSpec((1, ROW_SLAB_SUBLANES, ROW_SLAB_LANES),
                         lambda n: (n, 0, 0)),
            pl.BlockSpec((1, w_rows, w_lanes), lambda n: (n, 0, 0)),
        ],
        out_specs=pl.BlockSpec((1, B, out_dim), lambda n: (n, 0, 0)),
        compiler_params=pltpu.CompilerParams(
            dimension_semantics=("parallel",)),
    )(xa, rows, wslab)


# ----------------------------------------------------------------------------
# Init + pure-JAX reference (concat-based, for verification)
# ----------------------------------------------------------------------------
def init_params(key, input_dim, hidden_in_dim, hidden_out_dim, output_dim, action_size):
    """Deterministic init mirroring CriticNetwork.reset_parameters().

    Note: the reference hidden_init() uses weight.size()[0] (the OUT dim) as
    'fan_in' — reproduced exactly. Weights are stored pre-transposed (in, out).
    """
    bn_dim = hidden_in_dim + action_size * 2
    ks = jax.random.split(key, 6)

    lim1 = 1.0 / np.sqrt(hidden_in_dim)   # fc1.weight.size()[0]
    lim2 = 1.0 / np.sqrt(hidden_out_dim)  # fc2.weight.size()[0]
    lim3 = 0.001

    w1 = jax.random.uniform(ks[0], (input_dim, hidden_in_dim), jnp.float32, -lim1, lim1)
    w2 = jax.random.uniform(ks[1], (bn_dim, hidden_out_dim), jnp.float32, -lim2, lim2)
    w3 = jax.random.uniform(ks[2], (hidden_out_dim, output_dim), jnp.float32, -lim3, lim3)

    bl1 = 1.0 / np.sqrt(input_dim)
    bl2 = 1.0 / np.sqrt(bn_dim)
    bl3 = 1.0 / np.sqrt(hidden_out_dim)
    b1 = jax.random.uniform(ks[3], (1, hidden_in_dim), jnp.float32, -bl1, bl1)
    b2 = jax.random.uniform(ks[4], (1, hidden_out_dim), jnp.float32, -bl2, bl2)
    b3 = jax.random.uniform(ks[5], (1, output_dim), jnp.float32, -bl3, bl3)

    gamma = jnp.ones((1, bn_dim), jnp.float32)
    beta = jnp.zeros((1, bn_dim), jnp.float32)

    return dict(w1=w1, b1=b1, w2=w2, b2=b2, w3=w3, b3=b3, gamma=gamma, beta=beta)


def reference_forward(x, a, p):
    h1 = jnp.maximum(x @ p["w1"] + p["b1"], 0.0)
    cat = jnp.concatenate([h1, a], axis=1)
    mean = jnp.mean(cat, axis=0, keepdims=True)
    var = jnp.mean((cat - mean) ** 2, axis=0, keepdims=True)
    xn = (cat - mean) / jnp.sqrt(var + BN_EPS) * p["gamma"] + p["beta"]
    h2 = jnp.maximum(xn @ p["w2"] + p["b2"], 0.0)
    return h2 @ p["w3"] + p["b3"]


# TODO(synk): BatchNorm1d running-stat (running_mean/var) momentum updates are a
# training-time side effect of the PyTorch module and are not produced here.

if __name__ == "__main__":
    # Shapes consistent with the DDPG tennis critic:
    #   input_dim=24 (state), hidden_in=32, hidden_out=32, output_dim=1, action_size=2
    B, input_dim, hidden_in, hidden_out, out_dim, action_size = 8, 24, 32, 32, 1, 2
    action_dim = action_size * 2
    N_NETS = 2  # e.g. critic + target critic fused into one launch

    key = jax.random.PRNGKey(0)
    kx, ka, kp0, kp1 = jax.random.split(key, 4)

    x = jax.random.normal(kx, (B, input_dim), jnp.float32)
    a = jax.random.uniform(ka, (B, action_dim), jnp.float32, -1.0, 1.0)
    xa = jnp.concatenate([x, a], axis=1)                 # single packed activation input

    params_list = [
        init_params(k, input_dim, hidden_in, hidden_out, out_dim, action_size)
        for k in (kp0, kp1)
    ]

    # One-time packing (hoisted out of the per-step path).
    packed = [pack_params(p, input_dim, hidden_in, action_dim, hidden_out, out_dim)
              for p in params_list]
    rows_all = jnp.stack([r for (r, _, _) in packed])      # (N, 8, 128)
    wslab_all = jnp.stack([w for (_, w, _) in packed])     # (N, 96, 32)
    offsets = packed[0][2]

    xa_all = jnp.stack([xa] * N_NETS)                      # (N, B, 28)

    out = critic_forward(
        xa_all, rows_all, wslab_all,
        input_dim=input_dim, hidden_in=hidden_in, action_dim=action_dim,
        hidden_out=hidden_out, out_dim=out_dim, offsets=offsets)
    out = jax.block_until_ready(out)

    for n, p in enumerate(params_list):
        ref = reference_forward(x, a, p)
        np.testing.assert_allclose(np.asarray(out[n]), np.asarray(ref),
                                   rtol=1e-4, atol=1e-5)

    print("KERNEL_OK")
</pallas_src>

<mosaic_0001>
module attributes {stable_mosaic.version = 11 : i64} {
  func.func @kernel(%arg0: i32, %arg1: memref<1x8x28xf32, #tpu.memory_space<vmem>>, %arg2: memref<1x8x128xf32, #tpu.memory_space<vmem>>, %arg3: memref<1x96x32xf32, #tpu.memory_space<vmem>>, %arg4: memref<1x8x1xf32, #tpu.memory_space<vmem>>) attributes {dimension_semantics = [#tpu.dimension_semantics<parallel>], iteration_bounds = array<i64: 2>, scalar_prefetch = 0 : i64, scratch_operands = 0 : i64, tpu.core_type = #tpu.core_type<tc>, window_params = [{transform_indices = @transform_0, window_bounds = array<i64: 1, 8, 28>}, {transform_indices = @transform_1, window_bounds = array<i64: 1, 8, 128>}, {transform_indices = @transform_2, window_bounds = array<i64: 1, 96, 32>}, {transform_indices = @transform_3, window_bounds = array<i64: 1, 8, 1>}]} {
    %c0 = arith.constant 0 : index
    %c0_0 = arith.constant 0 : index
    %c0_1 = arith.constant 0 : index
    %0 = vector.load %arg1[%c0, %c0_0, %c0_1] : memref<1x8x28xf32, #tpu.memory_space<vmem>>, vector<1x8x28xf32>
    %1 = vector.shape_cast %0 : vector<1x8x28xf32> to vector<8x28xf32>
    %2 = vector.extract_strided_slice %1 {offsets = [0, 0], sizes = [8, 24], strides = [1, 1]} : vector<8x28xf32> to vector<8x24xf32>
    %3 = vector.extract_strided_slice %1 {offsets = [0, 24], sizes = [8, 4], strides = [1, 1]} : vector<8x28xf32> to vector<8x4xf32>
    %c0_2 = arith.constant 0 : index
    %c0_3 = arith.constant 0 : index
    %c0_4 = arith.constant 0 : index
    %4 = vector.load %arg2[%c0_2, %c0_3, %c0_4] : memref<1x8x128xf32, #tpu.memory_space<vmem>>, vector<1x8x128xf32>
    %5 = vector.shape_cast %4 : vector<1x8x128xf32> to vector<8x128xf32>
    %c0_5 = arith.constant 0 : index
    %c0_6 = arith.constant 0 : index
    %c0_7 = arith.constant 0 : index
    %6 = vector.load %arg3[%c0_5, %c0_6, %c0_7] : memref<1x96x32xf32, #tpu.memory_space<vmem>>, vector<1x96x32xf32>
    %7 = vector.shape_cast %6 : vector<1x96x32xf32> to vector<96x32xf32>
    %8 = vector.extract_strided_slice %5 {offsets = [0, 0], sizes = [1, 32], strides = [1, 1]} : vector<8x128xf32> to vector<1x32xf32>
    %9 = vector.extract_strided_slice %5 {offsets = [1, 0], sizes = [1, 32], strides = [1, 1]} : vector<8x128xf32> to vector<1x32xf32>
    %10 = vector.extract_strided_slice %5 {offsets = [2, 0], sizes = [1, 32], strides = [1, 1]} : vector<8x128xf32> to vector<1x32xf32>
    %11 = vector.extract_strided_slice %5 {offsets = [3, 0], sizes = [1, 4], strides = [1, 1]} : vector<8x128xf32> to vector<1x4xf32>
    %12 = vector.extract_strided_slice %5 {offsets = [4, 0], sizes = [1, 4], strides = [1, 1]} : vector<8x128xf32> to vector<1x4xf32>
    %13 = vector.extract_strided_slice %5 {offsets = [5, 0], sizes = [1, 32], strides = [1, 1]} : vector<8x128xf32> to vector<1x32xf32>
    %14 = vector.extract_strided_slice %5 {offsets = [6, 0], sizes = [1, 1], strides = [1, 1]} : vector<8x128xf32> to vector<1x1xf32>
    %15 = vector.extract_strided_slice %7 {offsets = [0, 0], sizes = [24, 32], strides = [1, 1]} : vector<96x32xf32> to vector<24x32xf32>
    %16 = vector.extract_strided_slice %7 {offsets = [24, 0], sizes = [32, 32], strides = [1, 1]} : vector<96x32xf32> to vector<32x32xf32>
    %17 = vector.extract_strided_slice %7 {offsets = [56, 0], sizes = [4, 32], strides = [1, 1]} : vector<96x32xf32> to vector<4x32xf32>
    %18 = vector.extract_strided_slice %7 {offsets = [64, 0], sizes = [32, 1], strides = [1, 1]} : vector<96x32xf32> to vector<32x1xf32>
    %cst = arith.constant dense<0.000000e+00> : vector<8x32xf32>
    %19 = tpu.matmul %2, %15, %cst {dimension_numbers = #tpu.dot_dimension_numbers<[1], [0], [0], [1], [0, 0, 1, 1], [], []>} : vector<8x24xf32>, vector<24x32xf32>, vector<8x32xf32> -> vector<8x32xf32>
    %20 = vector.broadcast %8 : vector<1x32xf32> to vector<8x32xf32>
    %21 = arith.addf %19, %20 : vector<8x32xf32>
    %cst_8 = arith.constant 0.000000e+00 : f32
    %22 = vector.broadcast %cst_8 : f32 to vector<8x32xf32>
    %23 = arith.maximumf %21, %22 : vector<8x32xf32>
    %cst_9 = arith.constant dense<0.000000e+00> : vector<32xf32>
    %24 = vector.multi_reduction <add>, %23, %cst_9 [0] : vector<8x32xf32> to vector<32xf32>
    %25 = vector.shape_cast %24 : vector<32xf32> to vector<1x32xf32>
    %cst_10 = arith.constant 8.000000e+00 : f32
    %26 = vector.broadcast %cst_10 : f32 to vector<1x32xf32>
    %27 = arith.divf %25, %26 : vector<1x32xf32>
    %28 = arith.mulf %23, %23 : vector<8x32xf32>
    %cst_11 = arith.constant dense<0.000000e+00> : vector<32xf32>
    %29 = vector.multi_reduction <add>, %28, %cst_11 [0] : vector<8x32xf32> to vector<32xf32>
    %30 = vector.shape_cast %29 : vector<32xf32> to vector<1x32xf32>
    %cst_12 = arith.constant 8.000000e+00 : f32
    %31 = vector.broadcast %cst_12 : f32 to vector<1x32xf32>
    %32 = arith.divf %30, %31 : vector<1x32xf32>
    %33 = arith.mulf %27, %27 : vector<1x32xf32>
    %34 = arith.subf %32, %33 : vector<1x32xf32>
    %cst_13 = arith.constant 0.000000e+00 : f32
    %35 = vector.broadcast %cst_13 : f32 to vector<1x32xf32>
    %36 = arith.maximumf %34, %35 : vector<1x32xf32>
    %cst_14 = arith.constant 9.99999974E-6 : f32
    %37 = vector.broadcast %cst_14 : f32 to vector<1x32xf32>
    %38 = arith.addf %36, %37 : vector<1x32xf32>
    %39 = math.rsqrt %38 : vector<1x32xf32>
    %40 = arith.mulf %9, %39 : vector<1x32xf32>
    %41 = arith.mulf %27, %40 : vector<1x32xf32>
    %42 = arith.subf %10, %41 : vector<1x32xf32>
    %43 = vector.broadcast %40 : vector<1x32xf32> to vector<8x32xf32>
    %44 = arith.mulf %23, %43 : vector<8x32xf32>
    %45 = vector.broadcast %42 : vector<1x32xf32> to vector<8x32xf32>
    %46 = arith.addf %44, %45 : vector<8x32xf32>
    %cst_15 = arith.constant dense<0.000000e+00> : vector<4xf32>
    %47 = vector.multi_reduction <add>, %3, %cst_15 [0] : vector<8x4xf32> to vector<4xf32>
    %48 = vector.shape_cast %47 : vector<4xf32> to vector<1x4xf32>
    %cst_16 = arith.constant 8.000000e+00 : f32
    %49 = vector.broadcast %cst_16 : f32 to vector<1x4xf32>
    %50 = arith.divf %48, %49 : vector<1x4xf32>
    %51 = arith.mulf %3, %3 : vector<8x4xf32>
    %cst_17 = arith.constant dense<0.000000e+00> : vector<4xf32>
    %52 = vector.multi_reduction <add>, %51, %cst_17 [0] : vector<8x4xf32> to vector<4xf32>
    %53 = vector.shape_cast %52 : vector<4xf32> to vector<1x4xf32>
    %cst_18 = arith.constant 8.000000e+00 : f32
    %54 = vector.broadcast %cst_18 : f32 to vector<1x4xf32>
    %55 = arith.divf %53, %54 : vector<1x4xf32>
    %56 = arith.mulf %50, %50 : vector<1x4xf32>
    %57 = arith.subf %55, %56 : vector<1x4xf32>
    %cst_19 = arith.constant 0.000000e+00 : f32
    %58 = vector.broadcast %cst_19 : f32 to vector<1x4xf32>
    %59 = arith.maximumf %57, %58 : vector<1x4xf32>
    %cst_20 = arith.constant 9.99999974E-6 : f32
    %60 = vector.broadcast %cst_20 : f32 to vector<1x4xf32>
    %61 = arith.addf %59, %60 : vector<1x4xf32>
    %62 = math.rsqrt %61 : vector<1x4xf32>
    %63 = arith.mulf %11, %62 : vector<1x4xf32>
    %64 = arith.mulf %50, %63 : vector<1x4xf32>
    %65 = arith.subf %12, %64 : vector<1x4xf32>
    %66 = vector.broadcast %63 : vector<1x4xf32> to vector<8x4xf32>
    %67 = arith.mulf %3, %66 : vector<8x4xf32>
    %68 = vector.broadcast %65 : vector<1x4xf32> to vector<8x4xf32>
    %69 = arith.addf %67, %68 : vector<8x4xf32>
    %cst_21 = arith.constant dense<0.000000e+00> : vector<8x32xf32>
    %70 = tpu.matmul %46, %16, %cst_21 {dimension_numbers = #tpu.dot_dimension_numbers<[1], [0], [0], [1], [0, 0, 1, 1], [], []>} : vector<8x32xf32>, vector<32x32xf32>, vector<8x32xf32> -> vector<8x32xf32>
    %cst_22 = arith.constant dense<0.000000e+00> : vector<8x32xf32>
    %71 = tpu.matmul %69, %17, %cst_22 {dimension_numbers = #tpu.dot_dimension_numbers<[1], [0], [0], [1], [0, 0, 1, 1], [], []>} : vector<8x4xf32>, vector<4x32xf32>, vector<8x32xf32> -> vector<8x32xf32>
    %72 = arith.addf %70, %71 : vector<8x32xf32>
    %73 = vector.broadcast %13 : vector<1x32xf32> to vector<8x32xf32>
    %74 = arith.addf %72, %73 : vector<8x32xf32>
    %cst_23 = arith.constant 0.000000e+00 : f32
    %75 = vector.broadcast %cst_23 : f32 to vector<8x32xf32>
    %76 = arith.maximumf %74, %75 : vector<8x32xf32>
    %cst_24 = arith.constant dense<0.000000e+00> : vector<8x1xf32>
    %77 = tpu.matmul %76, %18, %cst_24 {dimension_numbers = #tpu.dot_dimension_numbers<[1], [0], [0], [1], [0, 0, 1, 1], [], []>} : vector<8x32xf32>, vector<32x1xf32>, vector<8x1xf32> -> vector<8x1xf32>
    %78 = vector.broadcast %14 : vector<1x1xf32> to vector<8x1xf32>
    %79 = arith.addf %77, %78 : vector<8x1xf32>
    %c0_25 = arith.constant 0 : index
    %c0_26 = arith.constant 0 : index
    %c0_27 = arith.constant 0 : index
    %80 = vector.load %arg4[%c0_25, %c0_26, %c0_27] : memref<1x8x1xf32, #tpu.memory_space<vmem>>, vector<1x8x1xf32>
    %81 = vector.shape_cast %80 : vector<1x8x1xf32> to vector<8x1xf32>
    %82 = vector.shape_cast %79 : vector<8x1xf32> to vector<1x8x1xf32>
    tpu.vector_store %arg4[%c0_25, %c0_26, %c0_27], %82 {strides = array<i32>} : memref<1x8x1xf32, #tpu.memory_space<vmem>>, vector<1x8x1xf32>,
    return
  }
  func.func @transform_0(%arg0: i32) -> (i32, i32, i32) {
    %c0_i32 = arith.constant 0 : i32
    %c0_i32_0 = arith.constant 0 : i32
    %c0_i32_1 = arith.constant 0 : i32
    return %arg0, %c0_i32, %c0_i32_0 : i32, i32, i32
  }
  func.func @transform_1(%arg0: i32) -> (i32, i32, i32) {
    %c0_i32 = arith.constant 0 : i32
    %c0_i32_0 = arith.constant 0 : i32
    %c0_i32_1 = arith.constant 0 : i32
    return %arg0, %c0_i32, %c0_i32_0 : i32, i32, i32
  }
  func.func @transform_2(%arg0: i32) -> (i32, i32, i32) {
    %c0_i32 = arith.constant 0 : i32
    %c0_i32_0 = arith.constant 0 : i32
    %c0_i32_1 = arith.constant 0 : i32
    return %arg0, %c0_i32, %c0_i32_0 : i32, i32, i32
  }
  func.func @transform_3(%arg0: i32) -> (i32, i32, i32) {
    %c0_i32 = arith.constant 0 : i32
    %c0_i32_0 = arith.constant 0 : i32
    %c0_i32_1 = arith.constant 0 : i32
    return %arg0, %c0_i32, %c0_i32_0 : i32, i32, i32
  }
}

</mosaic_0001>

<llo_original>
// kernel: tpu_custom_call.1
$region0: #{tpu_custom_call.1}
  #allocation0 [shape = 'u32[]', space=smem, size = 0x4, offset = 0x4, fixed_abs, tag = 'smem constant byte address 0x4 - core index']
  #allocation1 [shape = 'u32[144,128]{1,0:T(1,128)}', space=vmem, size = 0x12000, scoped, tag = 'internal scratch']
  %s0 = inlined_call_operand.vmem [shape: f32[2,8,28], index: 0, kind: input, shape index: {}]
  %s1 = inlined_call_operand.vmem [shape: f32[2,8,128], index: 1, kind: input, shape index: {}]
  %s2 = inlined_call_operand.vmem [shape: f32[2,96,32], index: 2, kind: input, shape index: {}]
  %s3 = inlined_call_operand.vmem [shape: f32[2,8,1], index: 3, kind: output, shape index: {}]
  %s4 = sld [smem:[#allocation0]]
  $region45: #{tpu_custom_call.1} parent=0
    _
  %s6 = ssub.s32 1, %s4
  %s7 = scalar_select 0, %s6, %s4
  loop: start=0, step=1, limit=4
  $region2: #{tpu_custom_call.1} parent=0 // loop_pre_header
    _
  $region3: #{tpu_custom_call.1} parent=0 // loop_header
    %s9 = sphi 0, %s13
    %p10 = scmp.ge.s32.totalorder %s9, 4
    %s19 = sphi 0, %s21
    %s22 = sphi 0, %s19
    %s23 = sphi 0, %s22
    %s39 = sphi 0, %s23
    %s45 = sphi 0, %s47
    %s48 = sphi 0, %s45
    %s49 = sphi 0, %s48
    %s65 = sphi 0, %s49
    %s71 = sphi 0, %s73
    %s74 = sphi 0, %s71
    %s75 = sphi 0, %s74
    %s91 = sphi 0, %s75
    %s97 = sphi 0, %s99
    %s100 = sphi 0, %s97
    %s101 = sphi 0, %s100
    %s117 = sphi 0, %s101
  $region4: #{tpu_custom_call.1} parent=0 // loop_header_branch
    %12 = sbr.rel (%p10) target = $region8
  $region5: #{tpu_custom_call.1} parent=0 // loop_body
    %s14 = ssub.s32 %s9, 1
    %s15 = ssub.s32 %s9, 2
    %s16 = sadd.s32 %s9, 1
    %s17 = ssub.s32 %s9, %s16
    %p18 = scmp.eq.s32.totalorder %s17, 0
    %s20 = sadd.s32 %s19, 1
    %s21 = scalar_select %p18, %s19, %s20
    %p24 = pneg %p18
    %p25 = scmp.eq.s32.totalorder %s9, 1
    %p26 = por %p24, %p25
    %p27 = scmp.ne.s32.totalorder %s19, %s22
    %p28 = scmp.eq.s32.totalorder %s9, 0
    %p29 = por %p27, %p28
    %p30 = scmp.ne.s32.totalorder %s19, %s22
    %p31 = scmp.eq.s32.totalorder %s14, 1
    %p32 = por %p30, %p31
    %p33 = scmp.ne.s32.totalorder %s22, %s23
    %p34 = scmp.eq.s32.totalorder %s14, 0
    %p35 = por %p33, %p34
    %p36 = scmp.ne.s32.totalorder %s22, %s23
    %p37 = scmp.eq.s32.totalorder %s15, 1
    %p38 = por %p36, %p37
    %p40 = scmp.ne.s32.totalorder %s23, %s39
    %p41 = scmp.eq.s32.totalorder %s15, 0
    %p42 = por %p40, %p41
    %s43 = ssub.s32 %s9, %s16
    %p44 = scmp.eq.s32.totalorder %s43, 0
    %s46 = sadd.s32 %s45, 1
    %s47 = scalar_select %p44, %s45, %s46
    %p50 = pneg %p44
    %p51 = scmp.eq.s32.totalorder %s9, 1
    %p52 = por %p50, %p51
    %p53 = scmp.ne.s32.totalorder %s45, %s48
    %p54 = scmp.eq.s32.totalorder %s9, 0
    %p55 = por %p53, %p54
    %p56 = scmp.ne.s32.totalorder %s45, %s48
    %p57 = scmp.eq.s32.totalorder %s14, 1
    %p58 = por %p56, %p57
    %p59 = scmp.ne.s32.totalorder %s48, %s49
    %p60 = scmp.eq.s32.totalorder %s14, 0
    %p61 = por %p59, %p60
    %p62 = scmp.ne.s32.totalorder %s48, %s49
    %p63 = scmp.eq.s32.totalorder %s15, 1
    %p64 = por %p62, %p63
    %p66 = scmp.ne.s32.totalorder %s49, %s65
    %p67 = scmp.eq.s32.totalorder %s15, 0
    %p68 = por %p66, %p67
    %s69 = ssub.s32 %s9, %s16
    %p70 = scmp.eq.s32.totalorder %s69, 0
    %s72 = sadd.s32 %s71, 1
    %s73 = scalar_select %p70, %s71, %s72
    %p76 = pneg %p70
    %p77 = scmp.eq.s32.totalorder %s9, 1
    %p78 = por %p76, %p77
    %p79 = scmp.ne.s32.totalorder %s71, %s74
    %p80 = scmp.eq.s32.totalorder %s9, 0
    %p81 = por %p79, %p80
    %p82 = scmp.ne.s32.totalorder %s71, %s74
    %p83 = scmp.eq.s32.totalorder %s14, 1
    %p84 = por %p82, %p83
    %p85 = scmp.ne.s32.totalorder %s74, %s75
    %p86 = scmp.eq.s32.totalorder %s14, 0
    %p87 = por %p85, %p86
    %p88 = scmp.ne.s32.totalorder %s74, %s75
    %p89 = scmp.eq.s32.totalorder %s15, 1
    %p90 = por %p88, %p89
    %p92 = scmp.ne.s32.totalorder %s75, %s91
    %p93 = scmp.eq.s32.totalorder %s15, 0
    %p94 = por %p92, %p93
    %s95 = ssub.s32 %s9, %s16
    %p96 = scmp.eq.s32.totalorder %s95, 0
    %s98 = sadd.s32 %s97, 1
    %s99 = scalar_select %p96, %s97, %s98
    %p102 = pneg %p96
    %p103 = scmp.eq.s32.totalorder %s9, 1
    %p104 = por %p102, %p103
    %p105 = scmp.ne.s32.totalorder %s97, %s100
    %p106 = scmp.eq.s32.totalorder %s9, 0
    %p107 = por %p105, %p106
    %p108 = scmp.ne.s32.totalorder %s97, %s100
    %p109 = scmp.eq.s32.totalorder %s14, 1
    %p110 = por %p108, %p109
    %p111 = scmp.ne.s32.totalorder %s100, %s101
    %p112 = scmp.eq.s32.totalorder %s14, 0
    %p113 = por %p111, %p112
    %p114 = scmp.ne.s32.totalorder %s100, %s101
    %p115 = scmp.eq.s32.totalorder %s15, 1
    %p116 = por %p114, %p115
    %p118 = scmp.ne.s32.totalorder %s101, %s117
    %p119 = scmp.eq.s32.totalorder %s15, 0
    %p120 = por %p118, %p119
    %p121 = scmp.le.s32.totalorder 1, %s9
    %p122 = scmp.lt.s32.totalorder %s9, 3
    %p123 = pnand %p121, %p122
    %p124 = pneg %p123
    // Predicated region
    $region9: #{tpu_custom_call.1} parent=5 // pred_check
      _
    $region10: #{tpu_custom_call.1} parent=5 // pred_check_branch
      %126 = sbr.rel (%p123) target = $region12
    $region11: #{tpu_custom_call.1} parent=5 // pred_region
      %s127 = ssub.s32 %s9, 1
    $region12: #{tpu_custom_call.1} parent=5 // pred_fallthru
      _
    %p128 = scmp.lt.s32.totalorder %s9, 2
    // Predicated region
    $region13: #{tpu_custom_call.1} parent=5 // pred_check
      %p129 = pneg %p128
    $region14: #{tpu_custom_call.1} parent=5 // pred_check_branch
      %131 = sbr.rel (%p129) target = $region16
    $region15: #{tpu_custom_call.1} parent=5 // pred_region
      // Predicated region
      $region17: #{tpu_custom_call.1} parent=15 // pred_check
        %p132 = pneg %p29
      $region18: #{tpu_custom_call.1} parent=15 // pred_check_branch
        %134 = sbr.rel (%p132) target = $region20
      $region19: #{tpu_custom_call.1} parent=15 // pred_region
        %p135 = scmp.lt.s32.totalorder %s9, 1
        %s136 = scalar_select %p135, %s9, 1
        %s137 = smul.addr %s136, 8
        %s138 = scalar_lea.vmem %s0, %s137
      $region20: #{tpu_custom_call.1} parent=15 // pred_fallthru
        _
      // Predicated region
      $region21: #{tpu_custom_call.1} parent=15 // pred_check
        %p139 = pneg %p55
      $region22: #{tpu_custom_call.1} parent=15 // pred_check_branch
        %141 = sbr.rel (%p139) target = $region24
      $region23: #{tpu_custom_call.1} parent=15 // pred_region
        %p142 = scmp.lt.s32.totalorder %s9, 1
        %s143 = scalar_select %p142, %s9, 1
        %s144 = smul.addr %s143, 8
        %s145 = scalar_lea.vmem %s1, %s144
      $region24: #{tpu_custom_call.1} parent=15 // pred_fallthru
        _
      // Predicated region
      $region25: #{tpu_custom_call.1} parent=15 // pred_check
        %p146 = pneg %p81
      $region26: #{tpu_custom_call.1} parent=15 // pred_check_branch
        %148 = sbr.rel (%p146) target = $region28
      $region27: #{tpu_custom_call.1} parent=15 // pred_region
        %p149 = scmp.lt.s32.totalorder %s9, 1
        %s150 = scalar_select %p149, %s9, 1
        %s151 = smul.addr %s150, 12
        %s152 = smul.addr %s151, 8
        %s153 = scalar_lea.vmem %s2, %s152
      $region28: #{tpu_custom_call.1} parent=15 // pred_fallthru
        _
    $region16: #{tpu_custom_call.1} parent=5 // pred_fallthru
      _
    %p154 = scmp.le.s32.totalorder 1, %s9
    %p155 = scmp.lt.s32.totalorder %s9, 3
    %p156 = pnand %p154, %p155
    %p157 = pneg %p156
    // Predicated region
    $region29: #{tpu_custom_call.1} parent=5 // pred_check
      _
    $region30: #{tpu_custom_call.1} parent=5 // pred_check_branch
      %159 = sbr.rel (%p156) target = $region32
    $region31: #{tpu_custom_call.1} parent=5 // pred_region
      %s160 = ssub.s32 %s9, 1
      %p161 = scmp.lt.s32.totalorder %s14, 1
      %s162 = scalar_select %p161, %s14, 1
      %s163 = smul.addr %s162, 8
      %s164 = scalar_lea.vmem %s0, %s163
      %p165 = pneg %p35
      %p166 = pneg %p32
      %p167 = scmp.lt.s32.totalorder %s14, 1
      %s168 = scalar_select %p167, %s14, 1
      %s169 = smul.addr %s168, 8
      %s170 = scalar_lea.vmem %s1, %s169
      %p171 = pneg %p61
      %p172 = pneg %p58
      %p173 = scmp.lt.s32.totalorder %s14, 1
      %s174 = scalar_select %p173, %s14, 1
      %s175 = smul.addr %s174, 12
      %s176 = smul.addr %s175, 8
      %s177 = scalar_lea.vmem %s2, %s176
      %p178 = pneg %p87
      %p179 = pneg %p84
      %p180 = pneg %p113
      %p181 = pneg %p110
      %p182 = scmp.lt.s32.totalorder %s14, 1
      %s183 = scalar_select %p182, %s14, 1
      %s184 = smul.addr %s183, 8
      %s185 = scalar_lea.vmem %s3, %s184
      %p186 = scmp.lt.s32.totalorder %s14, 1
      %s187 = scalar_select %p186, %s14, 1
      %s188 = smul.addr %s187, 8
      %s189 = scalar_lea.vmem %s0, %s188
      %p190 = scmp.lt.s32.totalorder %s14, 1
      %s191 = scalar_select %p190, %s14, 1
      %s192 = smul.addr %s191, 8
      %s193 = scalar_lea.vmem %s1, %s192
      %p194 = scmp.lt.s32.totalorder %s14, 1
      %s195 = scalar_select %p194, %s14, 1
      %s196 = smul.addr %s195, 12
      %s197 = smul.addr %s196, 8
      %s198 = scalar_lea.vmem %s2, %s197
      %p199 = scmp.lt.s32.totalorder %s14, 1
      %s200 = scalar_select %p199, %s14, 1
      %s201 = smul.addr %s200, 8
      %s202 = scalar_lea.vmem %s3, %s201
      %v203 = vld [vmem:[%s189] sm:$0xff]
      %v204 = vld [vmem:[%s193] sm:$0xff]
      %v205 = vld [vmem:[%s198] sm:$0xff]
      %v206 = vld [vmem:[%s198 + $0x8] sm:$0xff]
      %v207 = vld [vmem:[%s198 + $0x10] sm:$0xff]
      %v208 = vld [vmem:[%s198 + $0x18] sm:$0xff]
      %v209 = vld [vmem:[%s198 + $0x20] sm:$0xff]
      %v210 = vld [vmem:[%s198 + $0x28] sm:$0xff]
      %v211 = vld [vmem:[%s198 + $0x30] sm:$0xff]
      %v212 = vld [vmem:[%s198 + $0x38] sm:$0xff]
      %v213 = vld [vmem:[%s198 + $0x40] sm:$0xff]
      %v214 = vld [vmem:[%s198 + $0x48] sm:$0xff]
      %v215 = vld [vmem:[%s198 + $0x50] sm:$0xff]
      %v216 = vld [vmem:[%s198 + $0x58] sm:$0xff]
      %v217 = vlaneseq
      %v218 = vshrl.u32 %v217, 7
      %v219 = vsub.s32 0, %v218
      %v220 = vrot.slane %v204, %v219
      %vm221 = vcmask 195584
      %v223 = vsel %vm221, %v203, 0
      %225 = vmatprep.subr.mxu0 0.0
      %226 = vmatpush1.msra.mxu0 %v205
      %227 = vmatprep.subr.mxu0 0.0
      %228 = vmatpush1.msra.mxu0 %v206
      %229 = vmatprep.subr.mxu0 0.0
      %230 = vmatpush1.msra.mxu0 %v207
      %231 = vmatprep.subr.mxu0 0.0
      %232 = vmatpush1.msra.mxu0 0.0
      %233 = vmatprep.subr.mxu0 0.0
      %234 = vmatpush1.msra.mxu0 0.0
      %235 = vmatprep.subr.mxu0 0.0
      %236 = vmatpush1.msra.mxu0 0.0
      %237 = vmatprep.subr.mxu0 0.0
      %238 = vmatpush1.msra.mxu0 0.0
      %239 = vmatprep.subr.mxu0 0.0
      %240 = vmatpush1.msra.mxu0 0.0
      %241 = vmatprep.subr.mxu0 0.0
      %242 = vmatpush1.msra.mxu0 0.0
      %243 = vmatprep.subr.mxu0 0.0
      %244 = vmatpush1.msra.mxu0 0.0
      %245 = vmatprep.subr.mxu0 0.0
      %246 = vmatpush1.msra.mxu0 0.0
      %247 = vmatprep.subr.mxu0 0.0
      %248 = vmatpush1.msra.mxu0 0.0
      %249 = vmatprep.subr.mxu0 0.0
      %250 = vmatpush1.msra.mxu0 0.0
      %251 = vmatprep.subr.mxu0 0.0
      %252 = vmatpush1.msra.mxu0 0.0
      %253 = vmatprep.subr.mxu0 0.0
      %254 = vmatpush1.msra.mxu0 0.0
      %255 = vmatprep.subr.mxu0 0.0
      %256 = vmatpush1.msra.mxu0 0.0
      %257 = vmatprep.subr.mxu0 0.0
      %258 = vmatpush1.msra.mxu0 0.0
      %259 = vmatprep.subr.mxu0 0.0
      %260 = vmatpush1.msra.mxu0 0.0
      %261 = vmatprep.subr.mxu0 0.0
      %262 = vmatpush1.msra.mxu0 0.0
      %263 = vmatprep.subr.mxu0 0.0
      %264 = vmatpush1.msra.mxu0 0.0
      %265 = vmatprep.subr.mxu0 0.0
      %266 = vmatpush1.msra.mxu0 0.0
      %267 = vmatprep.subr.mxu0 0.0
      %268 = vmatpush1.msra.mxu0 0.0
      %269 = vmatprep.subr.mxu0 0.0
      %270 = vmatpush1.msra.mxu0 0.0
      %271 = vmatprep.subr.mxu0 0.0
      %272 = vmatpush1.msra.mxu0 0.0
      %273 = vmatprep.subr.mxu0 0.0
      %274 = vmatpush1.msra.mxu0 0.0
      %275 = vmatprep.subr.mxu0 0.0
      %276 = vmatpush1.msra.mxu0 0.0
      %277 = vmatprep.subr.mxu0 0.0
      %278 = vmatpush1.msra.mxu0 0.0
      %279 = vmatprep.subr.mxu0 0.0
      %280 = vmatpush1.msra.mxu0 0.0
      %281 = vmatprep.subr.mxu0 0.0
      %282 = vmatpush1.msra.mxu0 0.0
      %283 = vmatprep.subr.mxu0 0.0
      %284 = vmatpush1.msra.mxu0 0.0
      %285 = vmatprep.subr.mxu0 0.0
      %286 = vmatpush1.msra.mxu0 0.0
      %287 = vmatprep.subr.mxu0 0.0
      %288 = vmatpush1.msra.mxu0 0.0
      %289 = vmatprep.mubr.f32.mxu0 0.0
      %290 = vmatmul.mubr.f32.gmra.mrb[0].mxu0 %v223
      %v291 = vpop.f32.mrb[0].mxu0
      %v292 = vadd.f32 %v220, %v291
      %v293 = vpop.f32.mrb[0].mxu0
      %294 = vdwg.mxu0
      %v295 = vmax.f32 %v292, 0.0
      %vm296 = vcmask 261120
      %v297 = vsel %vm296, %v295, 0.0
      %v298 = vrot.slane %v297, 4
      %v299 = vadd.f32 %v297, %v298
      %v300 = vrot.slane %v299, 2
      %v301 = vadd.f32 %v299, %v300
      %v302 = vrot.slane %v301, 1
      %v303 = vadd.f32 %v301, %v302
      %v304 = vrcp.pop 8.0
      %v305 = vmul.f32 %v303, %v304
      %v306 = vmul.f32 %v295, %v295
      %v307 = vsel %vm296, %v306, 0.0
      %v308 = vrot.slane %v307, 4
      %v309 = vadd.f32 %v307, %v308
      %v310 = vrot.slane %v309, 2
      %v311 = vadd.f32 %v309, %v310
      %v312 = vrot.slane %v311, 1
      %v313 = vadd.f32 %v311, %v312
      %v314 = vmul.f32 %v313, %v304
      %v315 = vmul.f32 %v305, %v305
      %v316 = vsub.f32 %v314, %v315
      %v317 = vmax.f32 %v316, 0.0
      %v318 = vadd.f32 %v317, 1e-05
      %v319 = vrsqrt.pop %v318
      %v320 = vmul.f32 %v204, %v319
      %v321 = vmul.f32 %v305, %v320
      %v323 = vrot.slane %v321, 7
      %v325 = vsub.f32 %v204, %v323
      %v326 = vlaneseq
      %v327 = vshrl.u32 %v326, 7
      %v328 = vsub.s32 1, %v327
      %v329 = vrot.slane %v320, %v328
      %v330 = vmul.f32 %v295, %v329
      %v331 = vlaneseq
      %v332 = vshrl.u32 %v331, 7
      %v333 = vsub.s32 2, %v332
      %v334 = vrot.slane %v325, %v333
      %v335 = vadd.f32 %v330, %v334
      %vm336 = vcmask 228544
      %v337 = vsel %vm336, %v203, 0.0
      %v338 = vrot.slane %v337, 4
      %v339 = vadd.f32 %v337, %v338
      %v340 = vrot.slane %v339, 2
      %v341 = vadd.f32 %v339, %v340
      %v342 = vrot.slane %v341, 1
      %v343 = vadd.f32 %v341, %v342
      %v344 = vmul.f32 %v343, %v304
      %v345 = vmul.f32 %v203, %v203
      %v346 = vsel %vm336, %v345, 0.0
      %v347 = vrot.slane %v346, 4
      %v348 = vadd.f32 %v346, %v347
      %v349 = vrot.slane %v348, 2
      %v350 = vadd.f32 %v348, %v349
      %v351 = vrot.slane %v350, 1
      %v352 = vadd.f32 %v350, %v351
      %v353 = vmul.f32 %v352, %v304
      %v354 = vmul.f32 %v344, %v344
      %v355 = vsub.f32 %v353, %v354
      %v356 = vmax.f32 %v355, 0.0
      %v357 = vadd.f32 %v356, 1e-05
      %v358 = vrsqrt.pop %v357
      %360 = vrot.lane.b32.xlu0 %v358, 104
      %v361 = vpop.permute.xlu0 %360
      %v363 = vmul.f32 %v204, %v361
      %v365 = vrot.slane %v363, 3
      %366 = vrot.lane.b32.xlu0 %v365, 24
      %v367 = vpop.permute.xlu0 %366
      %v369 = vmul.f32 %v344, %v367
      %v371 = vrot.slane %v369, 4
      %372 = vrot.lane.b32.xlu0 %v371, 104
      %v373 = vpop.permute.xlu0 %372
      %v375 = vsub.f32 %v204, %v373
      %v376 = vlaneseq
      %v377 = vshrl.u32 %v376, 7
      %v378 = vsub.s32 3, %v377
      %v379 = vrot.slane %v363, %v378
      %381 = vrot.lane.b32.xlu0 %v379, 24
      %v382 = vpop.permute.xlu0 %381
      %v384 = vmul.f32 %v203, %v382
      %v385 = vlaneseq
      %v386 = vshrl.u32 %v385, 7
      %v387 = vsub.s32 4, %v386
      %v388 = vrot.slane %v375, %v387
      %390 = vrot.lane.b32.xlu0 %v388, 24
      %v391 = vpop.permute.xlu0 %390
      %v393 = vadd.f32 %v384, %v391
      %395 = vrot.lane.b32.xlu0 %v393, 104
      %v396 = vpop.permute.xlu0 %395
      %vm397 = vcmask 31744
      %v398 = vsel %vm397, %v396, 0
      %vm400 = vcmask 1043456
      %v402 = vsel %vm400, %v212, 0
      %404 = vmatprep.subr.mxu0 0.0
      %405 = vmatpush1.msra.mxu0 %v402
      %406 = vmatprep.subr.mxu0 0.0
      %407 = vmatpush1.msra.mxu0 0.0
      %408 = vmatprep.subr.mxu0 0.0
      %409 = vmatpush1.msra.mxu0 0.0
      %410 = vmatprep.subr.mxu0 0.0
      %411 = vmatpush1.msra.mxu0 0.0
      %412 = vmatprep.subr.mxu0 0.0
      %413 = vmatpush1.msra.mxu0 0.0
      %414 = vmatprep.subr.mxu0 0.0
      %415 = vmatpush1.msra.mxu0 0.0
      %416 = vmatprep.subr.mxu0 0.0
      %417 = vmatpush1.msra.mxu0 0.0
      %418 = vmatprep.subr.mxu0 0.0
      %419 = vmatpush1.msra.mxu0 0.0
      %420 = vmatprep.subr.mxu0 0.0
      %421 = vmatpush1.msra.mxu0 0.0
      %422 = vmatprep.subr.mxu0 0.0
      %423 = vmatpush1.msra.mxu0 0.0
      %424 = vmatprep.subr.mxu0 0.0
      %425 = vmatpush1.msra.mxu0 0.0
      %426 = vmatprep.subr.mxu0 0.0
      %427 = vmatpush1.msra.mxu0 0.0
      %428 = vmatprep.subr.mxu0 0.0
      %429 = vmatpush1.msra.mxu0 0.0
      %430 = vmatprep.subr.mxu0 0.0
      %431 = vmatpush1.msra.mxu0 0.0
      %432 = vmatprep.subr.mxu0 0.0
      %433 = vmatpush1.msra.mxu0 0.0
      %434 = vmatprep.subr.mxu0 0.0
      %435 = vmatpush1.msra.mxu0 0.0
      %436 = vmatprep.subr.mxu0 0.0
      %437 = vmatpush1.msra.mxu0 0.0
      %438 = vmatprep.subr.mxu0 0.0
      %439 = vmatpush1.msra.mxu0 0.0
      %440 = vmatprep.subr.mxu0 0.0
      %441 = vmatpush1.msra.mxu0 0.0
      %442 = vmatprep.subr.mxu0 0.0
      %443 = vmatpush1.msra.mxu0 0.0
      %444 = vmatprep.subr.mxu0 0.0
      %445 = vmatpush1.msra.mxu0 0.0
      %446 = vmatprep.subr.mxu0 0.0
      %447 = vmatpush1.msra.mxu0 0.0
      %448 = vmatprep.subr.mxu0 0.0
      %449 = vmatpush1.msra.mxu0 0.0
      %450 = vmatprep.subr.mxu0 0.0
      %451 = vmatpush1.msra.mxu0 0.0
      %452 = vmatprep.subr.mxu0 0.0
      %453 = vmatpush1.msra.mxu0 0.0
      %454 = vmatprep.subr.mxu0 0.0
      %455 = vmatpush1.msra.mxu0 0.0
      %456 = vmatprep.subr.mxu0 0.0
      %457 = vmatpush1.msra.mxu0 0.0
      %458 = vmatprep.subr.mxu0 0.0
      %459 = vmatpush1.msra.mxu0 0.0
      %460 = vmatprep.subr.mxu0 0.0
      %461 = vmatpush1.msra.mxu0 0.0
      %462 = vmatprep.subr.mxu0 0.0
      %463 = vmatpush1.msra.mxu0 0.0
      %464 = vmatprep.subr.mxu0 0.0
      %465 = vmatpush1.msra.mxu0 0.0
      %466 = vmatprep.subr.mxu0 0.0
      %467 = vmatpush1.msra.mxu0 0.0
      %468 = vmatprep.mubr.f32.mxu0 0.0
      %469 = vmatmul.mubr.f32.gmra.mrb[0].mxu0 %v398
      %v470 = vpop.f32.mrb[0].mxu0
      %v471 = vadd.f32 0.0, %v470
      %v472 = vpop.f32.mrb[0].mxu0
      %473 = vdwg.mxu0
      %v475 = vsel %vm296, %v335, 0
      %477 = vmatprep.subr.mxu0 0.0
      %478 = vmatpush1.msra.mxu0 %v208
      %479 = vmatprep.subr.mxu0 0.0
      %480 = vmatpush1.msra.mxu0 %v209
      %481 = vmatprep.subr.mxu0 0.0
      %482 = vmatpush1.msra.mxu0 %v210
      %483 = vmatprep.subr.mxu0 0.0
      %484 = vmatpush1.msra.mxu0 %v211
      %485 = vmatprep.subr.mxu0 0.0
      %486 = vmatpush1.msra.mxu0 0.0
      %487 = vmatprep.subr.mxu0 0.0
      %488 = vmatpush1.msra.mxu0 0.0
      %489 = vmatprep.subr.mxu0 0.0
      %490 = vmatpush1.msra.mxu0 0.0
      %491 = vmatprep.subr.mxu0 0.0
      %492 = vmatpush1.msra.mxu0 0.0
      %493 = vmatprep.subr.mxu0 0.0
      %494 = vmatpush1.msra.mxu0 0.0
      %495 = vmatprep.subr.mxu0 0.0
      %496 = vmatpush1.msra.mxu0 0.0
      %497 = vmatprep.subr.mxu0 0.0
      %498 = vmatpush1.msra.mxu0 0.0
      %499 = vmatprep.subr.mxu0 0.0
      %500 = vmatpush1.msra.mxu0 0.0
      %501 = vmatprep.subr.mxu0 0.0
      %502 = vmatpush1.msra.mxu0 0.0
      %503 = vmatprep.subr.mxu0 0.0
      %504 = vmatpush1.msra.mxu0 0.0
      %505 = vmatprep.subr.mxu0 0.0
      %506 = vmatpush1.msra.mxu0 0.0
      %507 = vmatprep.subr.mxu0 0.0
      %508 = vmatpush1.msra.mxu0 0.0
      %509 = vmatprep.subr.mxu0 0.0
      %510 = vmatpush1.msra.mxu0 0.0
      %511 = vmatprep.subr.mxu0 0.0
      %512 = vmatpush1.msra.mxu0 0.0
      %513 = vmatprep.subr.mxu0 0.0
      %514 = vmatpush1.msra.mxu0 0.0
      %515 = vmatprep.subr.mxu0 0.0
      %516 = vmatpush1.msra.mxu0 0.0
      %517 = vmatprep.subr.mxu0 0.0
      %518 = vmatpush1.msra.mxu0 0.0
      %519 = vmatprep.subr.mxu0 0.0
      %520 = vmatpush1.msra.mxu0 0.0
      %521 = vmatprep.subr.mxu0 0.0
      %522 = vmatpush1.msra.mxu0 0.0
      %523 = vmatprep.subr.mxu0 0.0
      %524 = vmatpush1.msra.mxu0 0.0
      %525 = vmatprep.subr.mxu0 0.0
      %526 = vmatpush1.msra.mxu0 0.0
      %527 = vmatprep.subr.mxu0 0.0
      %528 = vmatpush1.msra.mxu0 0.0
      %529 = vmatprep.subr.mxu0 0.0
      %530 = vmatpush1.msra.mxu0 0.0
      %531 = vmatprep.subr.mxu0 0.0
      %532 = vmatpush1.msra.mxu0 0.0
      %533 = vmatprep.subr.mxu0 0.0
      %534 = vmatpush1.msra.mxu0 0.0
      %535 = vmatprep.subr.mxu0 0.0
      %536 = vmatpush1.msra.mxu0 0.0
      %537 = vmatprep.subr.mxu0 0.0
      %538 = vmatpush1.msra.mxu0 0.0
      %539 = vmatprep.subr.mxu0 0.0
      %540 = vmatpush1.msra.mxu0 0.0
      %541 = vmatprep.mubr.f32.mxu0 0.0
      %542 = vmatmul.mubr.f32.gmra.mrb[0].mxu0 %v475
      %v543 = vpop.f32.mrb[0].mxu0
      %v544 = vadd.f32 %v471, %v543
      %v545 = vpop.f32.mrb[0].mxu0
      %546 = vdwg.mxu0
      %v547 = vlaneseq
      %v548 = vshrl.u32 %v547, 7
      %v549 = vsub.s32 5, %v548
      %v550 = vrot.slane %v204, %v549
      %v551 = vadd.f32 %v544, %v550
      %v552 = vmax.f32 %v551, 0.0
      %v553 = vlaneseq
      %v554 = vshrl.u32 %v553, 7
      %v555 = vsub.s32 6, %v554
      %v556 = vrot.slane %v204, %v555
      %v558 = vsel %vm296, %v552, 0
      %560 = vmatprep.subr.mxu0 0.0
      %561 = vmatpush1.msra.mxu0 %v213
      %562 = vmatprep.subr.mxu0 0.0
      %563 = vmatpush1.msra.mxu0 %v214
      %564 = vmatprep.subr.mxu0 0.0
      %565 = vmatpush1.msra.mxu0 %v215
      %566 = vmatprep.subr.mxu0 0.0
      %567 = vmatpush1.msra.mxu0 %v216
      %568 = vmatprep.subr.mxu0 0.0
      %569 = vmatpush1.msra.mxu0 0.0
      %570 = vmatprep.subr.mxu0 0.0
      %571 = vmatpush1.msra.mxu0 0.0
      %572 = vmatprep.subr.mxu0 0.0
      %573 = vmatpush1.msra.mxu0 0.0
      %574 = vmatprep.subr.mxu0 0.0
      %575 = vmatpush1.msra.mxu0 0.0
      %576 = vmatprep.subr.mxu0 0.0
      %577 = vmatpush1.msra.mxu0 0.0
      %578 = vmatprep.subr.mxu0 0.0
      %579 = vmatpush1.msra.mxu0 0.0
      %580 = vmatprep.subr.mxu0 0.0
      %581 = vmatpush1.msra.mxu0 0.0
      %582 = vmatprep.subr.mxu0 0.0
      %583 = vmatpush1.msra.mxu0 0.0
      %584 = vmatprep.subr.mxu0 0.0
      %585 = vmatpush1.msra.mxu0 0.0
      %586 = vmatprep.subr.mxu0 0.0
      %587 = vmatpush1.msra.mxu0 0.0
      %588 = vmatprep.subr.mxu0 0.0
      %589 = vmatpush1.msra.mxu0 0.0
      %590 = vmatprep.subr.mxu0 0.0
      %591 = vmatpush1.msra.mxu0 0.0
      %592 = vmatprep.subr.mxu0 0.0
      %593 = vmatpush1.msra.mxu0 0.0
      %594 = vmatprep.subr.mxu0 0.0
      %595 = vmatpush1.msra.mxu0 0.0
      %596 = vmatprep.subr.mxu0 0.0
      %597 = vmatpush1.msra.mxu0 0.0
      %598 = vmatprep.subr.mxu0 0.0
      %599 = vmatpush1.msra.mxu0 0.0
      %600 = vmatprep.subr.mxu0 0.0
      %601 = vmatpush1.msra.mxu0 0.0
      %602 = vmatprep.subr.mxu0 0.0
      %603 = vmatpush1.msra.mxu0 0.0
      %604 = vmatprep.subr.mxu0 0.0
      %605 = vmatpush1.msra.mxu0 0.0
      %606 = vmatprep.subr.mxu0 0.0
      %607 = vmatpush1.msra.mxu0 0.0
      %608 = vmatprep.subr.mxu0 0.0
      %609 = vmatpush1.msra.mxu0 0.0
      %610 = vmatprep.subr.mxu0 0.0
      %611 = vmatpush1.msra.mxu0 0.0
      %612 = vmatprep.subr.mxu0 0.0
      %613 = vmatpush1.msra.mxu0 0.0
      %614 = vmatprep.subr.mxu0 0.0
      %615 = vmatpush1.msra.mxu0 0.0
      %616 = vmatprep.subr.mxu0 0.0
      %617 = vmatpush1.msra.mxu0 0.0
      %618 = vmatprep.subr.mxu0 0.0
      %619 = vmatpush1.msra.mxu0 0.0
      %620 = vmatprep.subr.mxu0 0.0
      %621 = vmatpush1.msra.mxu0 0.0
      %622 = vmatprep.subr.mxu0 0.0
      %623 = vmatpush1.msra.mxu0 0.0
      %624 = vmatprep.mubr.f32.mxu0 0.0
      %625 = vmatmul.mubr.f32.gmra.mrb[0].mxu0 %v558
      %v626 = vpop.f32.mrb[0].mxu0
      %v627 = vadd.f32 %v556, %v626
      %v628 = vpop.f32.mrb[0].mxu0
      %629 = vdwg.mxu0
      %vm630 = vcmask 7168
      %631 = vst.msk [vmem:[%s202] sm:$0xff] %vm630, %v627
      %p632 = scmp.lt.s32.totalorder %s14, 1
      %s633 = scalar_select %p632, %s14, 1
      %s634 = smul.addr %s633, 8
      %s635 = scalar_lea.vmem %s3, %s634
      // Predicated region
      $region33: #{tpu_custom_call.1} parent=31 // pred_check
        %p636 = pneg %p110
      $region34: #{tpu_custom_call.1} parent=31 // pred_check_branch
        %638 = sbr.rel (%p636) target = $region36
      $region35: #{tpu_custom_call.1} parent=31 // pred_region
        _
      $region36: #{tpu_custom_call.1} parent=31 // pred_fallthru
        _
    $region32: #{tpu_custom_call.1} parent=5 // pred_fallthru
      _
    %p639 = scmp.le.s32.totalorder 2, %s9
    // Predicated region
    $region37: #{tpu_custom_call.1} parent=5 // pred_check
      %p640 = pneg %p639
    $region38: #{tpu_custom_call.1} parent=5 // pred_check_branch
      %642 = sbr.rel (%p640) target = $region40
    $region39: #{tpu_custom_call.1} parent=5 // pred_region
      %s643 = ssub.s32 %s9, 2
      // Predicated region
      $region41: #{tpu_custom_call.1} parent=39 // pred_check
        %p644 = pneg %p116
      $region42: #{tpu_custom_call.1} parent=39 // pred_check_branch
        %646 = sbr.rel (%p644) target = $region44
      $region43: #{tpu_custom_call.1} parent=39 // pred_region
        %p647 = scmp.lt.s32.totalorder %s15, 1
        %s648 = scalar_select %p647, %s15, 1
        %s649 = smul.addr %s648, 8
        %s650 = scalar_lea.vmem %s3, %s649
      $region44: #{tpu_custom_call.1} parent=39 // pred_fallthru
        _
    $region40: #{tpu_custom_call.1} parent=5 // pred_fallthru
      _
  $region6: #{tpu_custom_call.1} parent=0 // loop_footer
    %s13 = sadd.s32 1, %s9
  $region7: #{tpu_custom_call.1} parent=0 // loop_footer_branch
    %8 = sbr.rel target = $region3
  $region8: #{tpu_custom_call.1} parent=0 // loop_exit
    _

</llo_original>
